<compile_context>
chip_gen: v7x
topology: tpu7x:2x2x1
jax: 0.10.0
libtpu: 0.0.40
codegen_flags: <defaults>
</compile_context>

<pallas_src>
import jax
import jax.numpy as jnp
from jax.experimental import pallas as pl
from jax.experimental.pallas import tpu as pltpu


def _make_dqn_kernel(num_chunks, chunk_rows, epilogue_dtype):
    """Build the fused 4-layer MLP kernel for a fixed batch-tile chunking."""
    edt = jnp.dtype(epilogue_dtype)

    def kernel(x_ref, w1_ref, w2_ref, w3_ref, w4_ref, b_ref, out_ref):
        cdt = w1_ref.dtype                        # MXU input dtype (bf16 or f32)
        n1 = w1_ref.shape[1]
        n2 = w2_ref.shape[1]
        n3 = w3_ref.shape[1]
        n4 = w4_ref.shape[1]

        b = b_ref[...]                            # [4, BMAX] f32 (one tiny load)
        b1 = b[0:1, 0:n1].astype(edt)             # 1-vreg casts; fc1..fc3 bias
        b2 = b[1:2, 0:n2].astype(edt)             # in the epilogue dtype so the
        b3 = b[2:3, 0:n3].astype(edt)             # bf16 activations don't promote
        b4 = b[3:4, 0:n4]                         # fc4 bias stays exact f32

        def dense(lhs, w_ref, bias, out_dtype):
            if lhs.dtype != cdt:
                lhs = lhs.astype(cdt)             # no-op when x is already bf16
            return jnp.dot(lhs, w_ref[...],
                           preferred_element_type=out_dtype) + bias

        # Two independent sub-chunks (straight-line unroll): chunk c+1's MXU
        # work overlaps chunk c's VPU epilogue.
        for c in range(num_chunks):
            lo, hi = c * chunk_rows, (c + 1) * chunk_rows
            x = x_ref[lo:hi, :]
            h = jnp.maximum(dense(x, w1_ref, b1, edt), 0.0)
            h = jnp.maximum(dense(h, w2_ref, b2, edt), 0.0)
            h = jnp.maximum(dense(h, w3_ref, b3, edt), 0.0)
            q = dense(h, w4_ref, b4, jnp.float32)           # fc4 in f32
            out_ref[lo:hi, :] = q.astype(out_ref.dtype)

    return kernel


def prepare_dqn_params(params, compute_dtype=jnp.bfloat16):
    """One-time conversion from PyTorch-convention params to kernel layout.

    params: dict with 'w1'..'w4' of shape [out, in] and 'b1'..'b4' of shape [out].
    Returns dict with 'w1'..'w4' as [in, out] in `compute_dtype` and a single
    'bias' block of shape [4, max_width] in f32 (rows zero-padded).
    """
    prepped = {}
    widths = []
    for i in (1, 2, 3, 4):
        w = params[f"w{i}"]
        prepped[f"w{i}"] = jnp.asarray(w.T, compute_dtype)     # [in, out]
        widths.append(w.shape[0])
    bmax = max(widths)
    assert widths[-1] <= bmax, "action_size must fit in the packed bias block"
    rows = [jnp.pad(params[f"b{i}"].astype(jnp.float32), (0, bmax - n))
            for i, n in zip((1, 2, 3, 4), widths)]
    prepped["bias"] = jnp.stack(rows, axis=0)                  # [4, bmax] f32
    return prepped


def _round_up(x, m):
    return ((x + m - 1) // m) * m


def dqn_forward(x, prepped, *, batch_tile=256, epilogue_dtype=None):
    """Run the DQN forward pass via a single fused, batch-tiled Pallas kernel.

    Args:
      x: [batch, state_size] input (f32 or bf16; bf16 avoids an in-kernel cast).
      prepped: output of prepare_dqn_params.
      batch_tile: max rows per grid step.
      epilogue_dtype: dtype for fc1..fc3 bias-add/ReLU. Default = weight dtype
        (bf16 on v6e/v7x). Pass jnp.float32 on v5e (no bf16 VALU).

    Returns:
      [batch, action_size] Q-values (float32).
    """
    batch, _ = x.shape
    w1, w2, w3, w4 = (prepped[f"w{i}"] for i in (1, 2, 3, 4))
    bias = prepped["bias"]
    state_size = w1.shape[0]
    action_size = w4.shape[1]
    if epilogue_dtype is None:
        epilogue_dtype = w1.dtype

    # Batch tile: cap at batch_tile; for batch >= 256 guarantee >= 2 grid steps
    # so the "parallel" axis actually shards across v7x's two TensorCores.
    if batch > batch_tile:
        tb = batch_tile
    elif batch >= 256:
        tb = min(batch_tile, _round_up(-(-batch // 2), 8))
    else:
        tb = batch
    grid = (pl.cdiv(batch, tb),)

    # In-kernel sub-chunking of the batch tile (MXU/VPU overlap).
    num_chunks = 2 if (tb >= 16 and tb % 16 == 0) else 1
    chunk_rows = tb // num_chunks

    def const_spec(a):
        return pl.BlockSpec(a.shape, lambda i: (0,) * a.ndim)

    in_specs = [
        pl.BlockSpec((tb, state_size), lambda i: (i, 0)),   # x: tiled over batch
        const_spec(w1), const_spec(w2), const_spec(w3), const_spec(w4),
        const_spec(bias),                                   # weights/bias resident
    ]
    out_spec = pl.BlockSpec((tb, action_size), lambda i: (i, 0))
    out_shape = jax.ShapeDtypeStruct((batch, action_size), jnp.float32)

    kernel = _make_dqn_kernel(num_chunks, chunk_rows, epilogue_dtype)
    return pl.pallas_call(
        kernel,
        out_shape=out_shape,
        grid=grid,
        in_specs=in_specs,
        out_specs=out_spec,
        compiler_params=pltpu.CompilerParams(
            dimension_semantics=("parallel",)),
    )(x, w1, w2, w3, w4, bias)


def init_dqn_params(state_size, action_size, key):
    """Deterministic parameter init matching nn.Linear shapes ([out, in])."""
    sizes = [(64, state_size), (128, 64), (64, 128), (action_size, 64)]
    params = {}
    for i, (fan_out, fan_in) in enumerate(sizes, start=1):
        key, kw, kb = jax.random.split(key, 3)
        bound = 1.0 / jnp.sqrt(fan_in)
        params[f"w{i}"] = jax.random.uniform(
            kw, (fan_out, fan_in), jnp.float32, -bound, bound)
        params[f"b{i}"] = jax.random.uniform(
            kb, (fan_out,), jnp.float32, -bound, bound)
    return params


def dqn_forward_ref(x, params):
    """Plain-JAX reference (PyTorch convention) for correctness checking."""
    h = x
    for i in (1, 2, 3):
        h = jnp.maximum(h @ params[f"w{i}"].T + params[f"b{i}"], 0.0)
    return h @ params["w4"].T + params["b4"]


if __name__ == "__main__":
    key = jax.random.PRNGKey(0)
    state_size, action_size, batch = 16, 4, 16

    k_params, k_x = jax.random.split(key)
    params = init_dqn_params(state_size, action_size, k_params)
    x = jax.random.normal(k_x, (batch, state_size), jnp.float32)

    q_ref = dqn_forward_ref(x, params)

    # f32 MXU path (exact semantics), small batch tile to exercise the grid.
    prepped_f32 = prepare_dqn_params(params, compute_dtype=jnp.float32)
    q_f32 = jax.block_until_ready(dqn_forward(x, prepped_f32, batch_tile=8))
    assert q_f32.shape == (batch, action_size)
    assert jnp.allclose(q_f32, q_ref, atol=1e-4, rtol=1e-4), "f32 mismatch vs reference"

    # bf16 MXU path with bf16 epilogue (v6e/v7x default) — exercises in-kernel
    # sub-chunking (tb=16 -> 2 chunks of 8).
    prepped_bf16 = prepare_dqn_params(params, compute_dtype=jnp.bfloat16)
    q_bf16 = jax.block_until_ready(dqn_forward(x, prepped_bf16))
    assert q_bf16.shape == (batch, action_size)
    assert jnp.allclose(q_bf16, q_ref, atol=5e-2, rtol=5e-2), "bf16 mismatch vs reference"

    # v5e-style path: bf16 weights on the MXU, f32 bias-add/ReLU epilogue.
    q_v5e = jax.block_until_ready(
        dqn_forward(x, prepped_bf16, epilogue_dtype=jnp.float32))
    assert jnp.allclose(q_v5e, q_ref, atol=5e-2, rtol=5e-2), "v5e-path mismatch"

    # bf16 input accepted directly (no in-kernel activation cast for fc1).
    q_xbf16 = jax.block_until_ready(
        dqn_forward(x.astype(jnp.bfloat16), prepped_bf16))
    assert jnp.allclose(q_xbf16, q_ref, atol=1e-1, rtol=1e-1), "bf16-x mismatch"

    print("KERNEL_OK")
</pallas_src>

<mosaic_0001>
module attributes {stable_mosaic.version = 11 : i64} {
  func.func @kernel(%arg0: i32, %arg1: memref<8x16xf32, #tpu.memory_space<vmem>>, %arg2: memref<16x64xf32, #tpu.memory_space<vmem>>, %arg3: memref<64x128xf32, #tpu.memory_space<vmem>>, %arg4: memref<128x64xf32, #tpu.memory_space<vmem>>, %arg5: memref<64x4xf32, #tpu.memory_space<vmem>>, %arg6: memref<4x128xf32, #tpu.memory_space<vmem>>, %arg7: memref<8x4xf32, #tpu.memory_space<vmem>>) attributes {dimension_semantics = [#tpu.dimension_semantics<parallel>], iteration_bounds = array<i64: 2>, scalar_prefetch = 0 : i64, scratch_operands = 0 : i64, tpu.core_type = #tpu.core_type<tc>, window_params = [{transform_indices = @transform_0, window_bounds = array<i64: 8, 16>}, {pipeline_mode = #tpu.pipeline_mode<synchronous>, transform_indices = @transform_1, window_bounds = array<i64: 16, 64>}, {pipeline_mode = #tpu.pipeline_mode<synchronous>, transform_indices = @transform_2, window_bounds = array<i64: 64, 128>}, {pipeline_mode = #tpu.pipeline_mode<synchronous>, transform_indices = @transform_3, window_bounds = array<i64: 128, 64>}, {pipeline_mode = #tpu.pipeline_mode<synchronous>, transform_indices = @transform_4, window_bounds = array<i64: 64, 4>}, {pipeline_mode = #tpu.pipeline_mode<synchronous>, transform_indices = @transform_5, window_bounds = array<i64: 4, 128>}, {transform_indices = @transform_6, window_bounds = array<i64: 8, 4>}]} {
    %c0 = arith.constant 0 : index
    %c0_0 = arith.constant 0 : index
    %0 = vector.load %arg6[%c0, %c0_0] : memref<4x128xf32, #tpu.memory_space<vmem>>, vector<4x128xf32>
    %1 = vector.extract_strided_slice %0 {offsets = [0, 0], sizes = [1, 64], strides = [1, 1]} : vector<4x128xf32> to vector<1x64xf32>
    %2 = vector.extract_strided_slice %0 {offsets = [1, 0], sizes = [1, 128], strides = [1, 1]} : vector<4x128xf32> to vector<1x128xf32>
    %3 = vector.extract_strided_slice %0 {offsets = [2, 0], sizes = [1, 64], strides = [1, 1]} : vector<4x128xf32> to vector<1x64xf32>
    %4 = vector.extract_strided_slice %0 {offsets = [3, 0], sizes = [1, 4], strides = [1, 1]} : vector<4x128xf32> to vector<1x4xf32>
    %c0_1 = arith.constant 0 : index
    %c0_2 = arith.constant 0 : index
    %5 = vector.load %arg1[%c0_1, %c0_2] : memref<8x16xf32, #tpu.memory_space<vmem>>, vector<8x16xf32>
    %c0_3 = arith.constant 0 : index
    %c0_4 = arith.constant 0 : index
    %6 = vector.load %arg2[%c0_3, %c0_4] : memref<16x64xf32, #tpu.memory_space<vmem>>, vector<16x64xf32>
    %cst = arith.constant dense<0.000000e+00> : vector<8x64xf32>
    %7 = tpu.matmul %5, %6, %cst {dimension_numbers = #tpu.dot_dimension_numbers<[1], [0], [0], [1], [0, 0, 1, 1], [], []>} : vector<8x16xf32>, vector<16x64xf32>, vector<8x64xf32> -> vector<8x64xf32>
    %8 = vector.broadcast %1 : vector<1x64xf32> to vector<8x64xf32>
    %9 = arith.addf %7, %8 : vector<8x64xf32>
    %cst_5 = arith.constant 0.000000e+00 : f32
    %10 = vector.broadcast %cst_5 : f32 to vector<8x64xf32>
    %11 = arith.maximumf %9, %10 : vector<8x64xf32>
    %c0_6 = arith.constant 0 : index
    %c0_7 = arith.constant 0 : index
    %12 = vector.load %arg3[%c0_6, %c0_7] : memref<64x128xf32, #tpu.memory_space<vmem>>, vector<64x128xf32>
    %cst_8 = arith.constant dense<0.000000e+00> : vector<8x128xf32>
    %13 = tpu.matmul %11, %12, %cst_8 {dimension_numbers = #tpu.dot_dimension_numbers<[1], [0], [0], [1], [0, 0, 1, 1], [], []>} : vector<8x64xf32>, vector<64x128xf32>, vector<8x128xf32> -> vector<8x128xf32>
    %14 = vector.broadcast %2 : vector<1x128xf32> to vector<8x128xf32>
    %15 = arith.addf %13, %14 : vector<8x128xf32>
    %cst_9 = arith.constant 0.000000e+00 : f32
    %16 = vector.broadcast %cst_9 : f32 to vector<8x128xf32>
    %17 = arith.maximumf %15, %16 : vector<8x128xf32>
    %c0_10 = arith.constant 0 : index
    %c0_11 = arith.constant 0 : index
    %18 = vector.load %arg4[%c0_10, %c0_11] : memref<128x64xf32, #tpu.memory_space<vmem>>, vector<128x64xf32>
    %cst_12 = arith.constant dense<0.000000e+00> : vector<8x64xf32>
    %19 = tpu.matmul %17, %18, %cst_12 {dimension_numbers = #tpu.dot_dimension_numbers<[1], [0], [0], [1], [0, 0, 1, 1], [], []>} : vector<8x128xf32>, vector<128x64xf32>, vector<8x64xf32> -> vector<8x64xf32>
    %20 = vector.broadcast %3 : vector<1x64xf32> to vector<8x64xf32>
    %21 = arith.addf %19, %20 : vector<8x64xf32>
    %cst_13 = arith.constant 0.000000e+00 : f32
    %22 = vector.broadcast %cst_13 : f32 to vector<8x64xf32>
    %23 = arith.maximumf %21, %22 : vector<8x64xf32>
    %c0_14 = arith.constant 0 : index
    %c0_15 = arith.constant 0 : index
    %24 = vector.load %arg5[%c0_14, %c0_15] : memref<64x4xf32, #tpu.memory_space<vmem>>, vector<64x4xf32>
    %cst_16 = arith.constant dense<0.000000e+00> : vector<8x4xf32>
    %25 = tpu.matmul %23, %24, %cst_16 {dimension_numbers = #tpu.dot_dimension_numbers<[1], [0], [0], [1], [0, 0, 1, 1], [], []>} : vector<8x64xf32>, vector<64x4xf32>, vector<8x4xf32> -> vector<8x4xf32>
    %26 = vector.broadcast %4 : vector<1x4xf32> to vector<8x4xf32>
    %27 = arith.addf %25, %26 : vector<8x4xf32>
    %c0_17 = arith.constant 0 : index
    %c0_18 = arith.constant 0 : index
    %28 = vector.load %arg7[%c0_17, %c0_18] : memref<8x4xf32, #tpu.memory_space<vmem>>, vector<8x4xf32>
    tpu.vector_store %arg7[%c0_17, %c0_18], %27 {strides = array<i32>} : memref<8x4xf32, #tpu.memory_space<vmem>>, vector<8x4xf32>,
    return
  }
  func.func @transform_0(%arg0: i32) -> (i32, i32) {
    %c0_i32 = arith.constant 0 : i32
    %c0_i32_0 = arith.constant 0 : i32
    return %arg0, %c0_i32 : i32, i32
  }
  func.func @transform_1(%arg0: i32) -> (i32, i32) {
    %c0_i32 = arith.constant 0 : i32
    %c0_i32_0 = arith.constant 0 : i32
    %c0_i32_1 = arith.constant 0 : i32
    return %c0_i32, %c0_i32_0 : i32, i32
  }
  func.func @transform_2(%arg0: i32) -> (i32, i32) {
    %c0_i32 = arith.constant 0 : i32
    %c0_i32_0 = arith.constant 0 : i32
    %c0_i32_1 = arith.constant 0 : i32
    return %c0_i32, %c0_i32_0 : i32, i32
  }
  func.func @transform_3(%arg0: i32) -> (i32, i32) {
    %c0_i32 = arith.constant 0 : i32
    %c0_i32_0 = arith.constant 0 : i32
    %c0_i32_1 = arith.constant 0 : i32
    return %c0_i32, %c0_i32_0 : i32, i32
  }
  func.func @transform_4(%arg0: i32) -> (i32, i32) {
    %c0_i32 = arith.constant 0 : i32
    %c0_i32_0 = arith.constant 0 : i32
    %c0_i32_1 = arith.constant 0 : i32
    return %c0_i32, %c0_i32_0 : i32, i32
  }
  func.func @transform_5(%arg0: i32) -> (i32, i32) {
    %c0_i32 = arith.constant 0 : i32
    %c0_i32_0 = arith.constant 0 : i32
    %c0_i32_1 = arith.constant 0 : i32
    return %c0_i32, %c0_i32_0 : i32, i32
  }
  func.func @transform_6(%arg0: i32) -> (i32, i32) {
    %c0_i32 = arith.constant 0 : i32
    %c0_i32_0 = arith.constant 0 : i32
    return %arg0, %c0_i32 : i32, i32
  }
}

</mosaic_0001>

<llo_original>
// kernel: tpu_custom_call.1
$region0: #{tpu_custom_call.1}
  #allocation0 [shape = 'u32[]', space=smem, size = 0x4, offset = 0x4, fixed_abs, tag = 'smem constant byte address 0x4 - core index']
  #allocation1 [shape = 'u32[144,128]{1,0:T(1,128)}', space=vmem, size = 0x12000, scoped, tag = 'internal scratch']
  %s0 = inlined_call_operand.vmem [shape: f32[16,16], index: 0, kind: input, shape index: {}]
  %s1 = inlined_call_operand.vmem [shape: f32[16,64], index: 1, kind: input, shape index: {}]
  %s2 = inlined_call_operand.vmem [shape: f32[64,128], index: 2, kind: input, shape index: {}]
  %s3 = inlined_call_operand.vmem [shape: f32[128,64], index: 3, kind: input, shape index: {}]
  %s4 = inlined_call_operand.vmem [shape: f32[64,4], index: 4, kind: input, shape index: {}]
  %s5 = inlined_call_operand.vmem [shape: f32[4,128], index: 5, kind: input, shape index: {}]
  %s6 = inlined_call_operand.vmem [shape: f32[16,4], index: 6, kind: output, shape index: {}]
  %s7 = sld [smem:[#allocation0]]
  $region57: #{tpu_custom_call.1} parent=0
    _
  %s9 = ssub.s32 1, %s7
  %s10 = scalar_select 0, %s9, %s7
  loop: start=0, step=1, limit=4
  $region2: #{tpu_custom_call.1} parent=0 // loop_pre_header
    _
  $region3: #{tpu_custom_call.1} parent=0 // loop_header
    %s12 = sphi 0, %s16
    %p13 = scmp.ge.s32.totalorder %s12, 4
    %s22 = sphi 0, %s24
    %s25 = sphi 0, %s22
    %s26 = sphi 0, %s25
    %s42 = sphi 0, %s26
    %s46 = sphi 0, %s46
    %s48 = sphi 0, %s46
    %s49 = sphi 0, %s48
    %s63 = sphi 0, %s49
    %s67 = sphi 0, %s67
    %s69 = sphi 0, %s67
    %s70 = sphi 0, %s69
    %s84 = sphi 0, %s70
    %s88 = sphi 0, %s88
    %s90 = sphi 0, %s88
    %s91 = sphi 0, %s90
    %s105 = sphi 0, %s91
    %s109 = sphi 0, %s109
    %s111 = sphi 0, %s109
    %s112 = sphi 0, %s111
    %s126 = sphi 0, %s112
    %s130 = sphi 0, %s130
    %s132 = sphi 0, %s130
    %s133 = sphi 0, %s132
    %s147 = sphi 0, %s133
    %s153 = sphi 0, %s155
    %s156 = sphi 0, %s153
    %s157 = sphi 0, %s156
    %s173 = sphi 0, %s157
  $region4: #{tpu_custom_call.1} parent=0 // loop_header_branch
    %15 = sbr.rel (%p13) target = $region8
  $region5: #{tpu_custom_call.1} parent=0 // loop_body
    %s17 = ssub.s32 %s12, 1
    %s18 = ssub.s32 %s12, 2
    %s19 = sadd.s32 %s12, 1
    %s20 = ssub.s32 %s12, %s19
    %p21 = scmp.eq.s32.totalorder %s20, 0
    %s23 = sadd.s32 %s22, 1
    %s24 = scalar_select %p21, %s22, %s23
    %p27 = pneg %p21
    %p28 = scmp.eq.s32.totalorder %s12, 1
    %p29 = por %p27, %p28
    %p30 = scmp.ne.s32.totalorder %s22, %s25
    %p31 = scmp.eq.s32.totalorder %s12, 0
    %p32 = por %p30, %p31
    %p33 = scmp.ne.s32.totalorder %s22, %s25
    %p34 = scmp.eq.s32.totalorder %s17, 1
    %p35 = por %p33, %p34
    %p36 = scmp.ne.s32.totalorder %s25, %s26
    %p37 = scmp.eq.s32.totalorder %s17, 0
    %p38 = por %p36, %p37
    %p39 = scmp.ne.s32.totalorder %s25, %s26
    %p40 = scmp.eq.s32.totalorder %s18, 1
    %p41 = por %p39, %p40
    %p43 = scmp.ne.s32.totalorder %s26, %s42
    %p44 = scmp.eq.s32.totalorder %s18, 0
    %p45 = por %p43, %p44
    %s47 = sadd.s32 %s46, 1
    %p50 = scmp.eq.s32.totalorder %s12, 1
    %p51 = scmp.ne.s32.totalorder %s46, %s48
    %p52 = scmp.eq.s32.totalorder %s12, 0
    %p53 = por %p51, %p52
    %p54 = scmp.ne.s32.totalorder %s46, %s48
    %p55 = scmp.eq.s32.totalorder %s17, 1
    %p56 = por %p54, %p55
    %p57 = scmp.ne.s32.totalorder %s48, %s49
    %p58 = scmp.eq.s32.totalorder %s17, 0
    %p59 = por %p57, %p58
    %p60 = scmp.ne.s32.totalorder %s48, %s49
    %p61 = scmp.eq.s32.totalorder %s18, 1
    %p62 = por %p60, %p61
    %p64 = scmp.ne.s32.totalorder %s49, %s63
    %p65 = scmp.eq.s32.totalorder %s18, 0
    %p66 = por %p64, %p65
    %s68 = sadd.s32 %s67, 1
    %p71 = scmp.eq.s32.totalorder %s12, 1
    %p72 = scmp.ne.s32.totalorder %s67, %s69
    %p73 = scmp.eq.s32.totalorder %s12, 0
    %p74 = por %p72, %p73
    %p75 = scmp.ne.s32.totalorder %s67, %s69
    %p76 = scmp.eq.s32.totalorder %s17, 1
    %p77 = por %p75, %p76
    %p78 = scmp.ne.s32.totalorder %s69, %s70
    %p79 = scmp.eq.s32.totalorder %s17, 0
    %p80 = por %p78, %p79
    %p81 = scmp.ne.s32.totalorder %s69, %s70
    %p82 = scmp.eq.s32.totalorder %s18, 1
    %p83 = por %p81, %p82
    %p85 = scmp.ne.s32.totalorder %s70, %s84
    %p86 = scmp.eq.s32.totalorder %s18, 0
    %p87 = por %p85, %p86
    %s89 = sadd.s32 %s88, 1
    %p92 = scmp.eq.s32.totalorder %s12, 1
    %p93 = scmp.ne.s32.totalorder %s88, %s90
    %p94 = scmp.eq.s32.totalorder %s12, 0
    %p95 = por %p93, %p94
    %p96 = scmp.ne.s32.totalorder %s88, %s90
    %p97 = scmp.eq.s32.totalorder %s17, 1
    %p98 = por %p96, %p97
    %p99 = scmp.ne.s32.totalorder %s90, %s91
    %p100 = scmp.eq.s32.totalorder %s17, 0
    %p101 = por %p99, %p100
    %p102 = scmp.ne.s32.totalorder %s90, %s91
    %p103 = scmp.eq.s32.totalorder %s18, 1
    %p104 = por %p102, %p103
    %p106 = scmp.ne.s32.totalorder %s91, %s105
    %p107 = scmp.eq.s32.totalorder %s18, 0
    %p108 = por %p106, %p107
    %s110 = sadd.s32 %s109, 1
    %p113 = scmp.eq.s32.totalorder %s12, 1
    %p114 = scmp.ne.s32.totalorder %s109, %s111
    %p115 = scmp.eq.s32.totalorder %s12, 0
    %p116 = por %p114, %p115
    %p117 = scmp.ne.s32.totalorder %s109, %s111
    %p118 = scmp.eq.s32.totalorder %s17, 1
    %p119 = por %p117, %p118
    %p120 = scmp.ne.s32.totalorder %s111, %s112
    %p121 = scmp.eq.s32.totalorder %s17, 0
    %p122 = por %p120, %p121
    %p123 = scmp.ne.s32.totalorder %s111, %s112
    %p124 = scmp.eq.s32.totalorder %s18, 1
    %p125 = por %p123, %p124
    %p127 = scmp.ne.s32.totalorder %s112, %s126
    %p128 = scmp.eq.s32.totalorder %s18, 0
    %p129 = por %p127, %p128
    %s131 = sadd.s32 %s130, 1
    %p134 = scmp.eq.s32.totalorder %s12, 1
    %p135 = scmp.ne.s32.totalorder %s130, %s132
    %p136 = scmp.eq.s32.totalorder %s12, 0
    %p137 = por %p135, %p136
    %p138 = scmp.ne.s32.totalorder %s130, %s132
    %p139 = scmp.eq.s32.totalorder %s17, 1
    %p140 = por %p138, %p139
    %p141 = scmp.ne.s32.totalorder %s132, %s133
    %p142 = scmp.eq.s32.totalorder %s17, 0
    %p143 = por %p141, %p142
    %p144 = scmp.ne.s32.totalorder %s132, %s133
    %p145 = scmp.eq.s32.totalorder %s18, 1
    %p146 = por %p144, %p145
    %p148 = scmp.ne.s32.totalorder %s133, %s147
    %p149 = scmp.eq.s32.totalorder %s18, 0
    %p150 = por %p148, %p149
    %s151 = ssub.s32 %s12, %s19
    %p152 = scmp.eq.s32.totalorder %s151, 0
    %s154 = sadd.s32 %s153, 1
    %s155 = scalar_select %p152, %s153, %s154
    %p158 = pneg %p152
    %p159 = scmp.eq.s32.totalorder %s12, 1
    %p160 = por %p158, %p159
    %p161 = scmp.ne.s32.totalorder %s153, %s156
    %p162 = scmp.eq.s32.totalorder %s12, 0
    %p163 = por %p161, %p162
    %p164 = scmp.ne.s32.totalorder %s153, %s156
    %p165 = scmp.eq.s32.totalorder %s17, 1
    %p166 = por %p164, %p165
    %p167 = scmp.ne.s32.totalorder %s156, %s157
    %p168 = scmp.eq.s32.totalorder %s17, 0
    %p169 = por %p167, %p168
    %p170 = scmp.ne.s32.totalorder %s156, %s157
    %p171 = scmp.eq.s32.totalorder %s18, 1
    %p172 = por %p170, %p171
    %p174 = scmp.ne.s32.totalorder %s157, %s173
    %p175 = scmp.eq.s32.totalorder %s18, 0
    %p176 = por %p174, %p175
    %p177 = scmp.le.s32.totalorder 1, %s12
    %p178 = scmp.lt.s32.totalorder %s12, 3
    %p179 = pnand %p177, %p178
    %p180 = pneg %p179
    // Predicated region
    $region9: #{tpu_custom_call.1} parent=5 // pred_check
      _
    $region10: #{tpu_custom_call.1} parent=5 // pred_check_branch
      %182 = sbr.rel (%p179) target = $region12
    $region11: #{tpu_custom_call.1} parent=5 // pred_region
      %s183 = ssub.s32 %s12, 1
      // Predicated region
      $region13: #{tpu_custom_call.1} parent=11 // pred_check
        %p184 = pneg %p59
      $region14: #{tpu_custom_call.1} parent=11 // pred_check_branch
        %186 = sbr.rel (%p184) target = $region16
      $region15: #{tpu_custom_call.1} parent=11 // pred_region
        _
      $region16: #{tpu_custom_call.1} parent=11 // pred_fallthru
        _
      // Predicated region
      $region17: #{tpu_custom_call.1} parent=11 // pred_check
        %p187 = pneg %p80
      $region18: #{tpu_custom_call.1} parent=11 // pred_check_branch
        %189 = sbr.rel (%p187) target = $region20
      $region19: #{tpu_custom_call.1} parent=11 // pred_region
        _
      $region20: #{tpu_custom_call.1} parent=11 // pred_fallthru
        _
      // Predicated region
      $region21: #{tpu_custom_call.1} parent=11 // pred_check
        %p190 = pneg %p101
      $region22: #{tpu_custom_call.1} parent=11 // pred_check_branch
        %192 = sbr.rel (%p190) target = $region24
      $region23: #{tpu_custom_call.1} parent=11 // pred_region
        _
      $region24: #{tpu_custom_call.1} parent=11 // pred_fallthru
        _
      // Predicated region
      $region25: #{tpu_custom_call.1} parent=11 // pred_check
        %p193 = pneg %p122
      $region26: #{tpu_custom_call.1} parent=11 // pred_check_branch
        %195 = sbr.rel (%p193) target = $region28
      $region27: #{tpu_custom_call.1} parent=11 // pred_region
        _
      $region28: #{tpu_custom_call.1} parent=11 // pred_fallthru
        _
      // Predicated region
      $region29: #{tpu_custom_call.1} parent=11 // pred_check
        %p196 = pneg %p143
      $region30: #{tpu_custom_call.1} parent=11 // pred_check_branch
        %198 = sbr.rel (%p196) target = $region32
      $region31: #{tpu_custom_call.1} parent=11 // pred_region
        _
      $region32: #{tpu_custom_call.1} parent=11 // pred_fallthru
        _
    $region12: #{tpu_custom_call.1} parent=5 // pred_fallthru
      _
    %p199 = scmp.lt.s32.totalorder %s12, 2
    // Predicated region
    $region33: #{tpu_custom_call.1} parent=5 // pred_check
      %p200 = pneg %p199
    $region34: #{tpu_custom_call.1} parent=5 // pred_check_branch
      %202 = sbr.rel (%p200) target = $region36
    $region35: #{tpu_custom_call.1} parent=5 // pred_region
      // Predicated region
      $region37: #{tpu_custom_call.1} parent=35 // pred_check
        %p203 = pneg %p32
      $region38: #{tpu_custom_call.1} parent=35 // pred_check_branch
        %205 = sbr.rel (%p203) target = $region40
      $region39: #{tpu_custom_call.1} parent=35 // pred_region
        %p206 = scmp.lt.s32.totalorder %s12, 1
        %s207 = scalar_select %p206, %s12, 1
        %s208 = smul.addr %s207, 8
        %s209 = scalar_lea.vmem %s0, %s208
      $region40: #{tpu_custom_call.1} parent=35 // pred_fallthru
        _
    $region36: #{tpu_custom_call.1} parent=5 // pred_fallthru
      _
    %p210 = scmp.le.s32.totalorder 1, %s12
    %p211 = scmp.lt.s32.totalorder %s12, 3
    %p212 = pnand %p210, %p211
    %p213 = pneg %p212
    // Predicated region
    $region41: #{tpu_custom_call.1} parent=5 // pred_check
      _
    $region42: #{tpu_custom_call.1} parent=5 // pred_check_branch
      %215 = sbr.rel (%p212) target = $region44
    $region43: #{tpu_custom_call.1} parent=5 // pred_region
      %s216 = ssub.s32 %s12, 1
      %p217 = scmp.lt.s32.totalorder %s17, 1
      %s218 = scalar_select %p217, %s17, 1
      %s219 = smul.addr %s218, 8
      %s220 = scalar_lea.vmem %s0, %s219
      %p221 = pneg %p38
      %p222 = pneg %p35
      %p223 = pneg %p59
      %p224 = pneg %p56
      %p225 = pneg %p80
      %p226 = pneg %p77
      %p227 = pneg %p101
      %p228 = pneg %p98
      %p229 = pneg %p122
      %p230 = pneg %p119
      %p231 = pneg %p143
      %p232 = pneg %p140
      %p233 = pneg %p169
      %p234 = pneg %p166
      %p235 = scmp.lt.s32.totalorder %s17, 1
      %s236 = scalar_select %p235, %s17, 1
      %s237 = smul.addr %s236, 8
      %s238 = scalar_lea.vmem %s6, %s237
      %p239 = scmp.lt.s32.totalorder %s17, 1
      %s240 = scalar_select %p239, %s17, 1
      %s241 = smul.addr %s240, 8
      %s242 = scalar_lea.vmem %s0, %s241
      %p243 = scmp.lt.s32.totalorder %s17, 1
      %s244 = scalar_select %p243, %s17, 1
      %s245 = smul.addr %s244, 8
      %s246 = scalar_lea.vmem %s6, %s245
      %v247 = vld [vmem:[%s5] sm:$0xf]
      %v248 = vld [vmem:[%s242] sm:$0xff]
      %v249 = vld [vmem:[%s1] sm:$0xff]
      %v250 = vld [vmem:[%s1 + $0x8] sm:$0xff]
      %v251 = vlaneseq
      %v252 = vshrl.u32 %v251, 7
      %v253 = vsub.s32 0, %v252
      %v254 = vrot.slane %v247, %v253
      %vm255 = vcmask 130048
      %v257 = vsel %vm255, %v248, 0
      %259 = vmatprep.subr.mxu0 0.0
      %260 = vmatpush1.msra.mxu0 %v249
      %261 = vmatprep.subr.mxu0 0.0
      %262 = vmatpush1.msra.mxu0 %v250
      %263 = vmatprep.subr.mxu0 0.0
      %264 = vmatpush1.msra.mxu0 0.0
      %265 = vmatprep.subr.mxu0 0.0
      %266 = vmatpush1.msra.mxu0 0.0
      %267 = vmatprep.subr.mxu0 0.0
      %268 = vmatpush1.msra.mxu0 0.0
      %269 = vmatprep.subr.mxu0 0.0
      %270 = vmatpush1.msra.mxu0 0.0
      %271 = vmatprep.subr.mxu0 0.0
      %272 = vmatpush1.msra.mxu0 0.0
      %273 = vmatprep.subr.mxu0 0.0
      %274 = vmatpush1.msra.mxu0 0.0
      %275 = vmatprep.subr.mxu0 0.0
      %276 = vmatpush1.msra.mxu0 0.0
      %277 = vmatprep.subr.mxu0 0.0
      %278 = vmatpush1.msra.mxu0 0.0
      %279 = vmatprep.subr.mxu0 0.0
      %280 = vmatpush1.msra.mxu0 0.0
      %281 = vmatprep.subr.mxu0 0.0
      %282 = vmatpush1.msra.mxu0 0.0
      %283 = vmatprep.subr.mxu0 0.0
      %284 = vmatpush1.msra.mxu0 0.0
      %285 = vmatprep.subr.mxu0 0.0
      %286 = vmatpush1.msra.mxu0 0.0
      %287 = vmatprep.subr.mxu0 0.0
      %288 = vmatpush1.msra.mxu0 0.0
      %289 = vmatprep.subr.mxu0 0.0
      %290 = vmatpush1.msra.mxu0 0.0
      %291 = vmatprep.subr.mxu0 0.0
      %292 = vmatpush1.msra.mxu0 0.0
      %293 = vmatprep.subr.mxu0 0.0
      %294 = vmatpush1.msra.mxu0 0.0
      %295 = vmatprep.subr.mxu0 0.0
      %296 = vmatpush1.msra.mxu0 0.0
      %297 = vmatprep.subr.mxu0 0.0
      %298 = vmatpush1.msra.mxu0 0.0
      %299 = vmatprep.subr.mxu0 0.0
      %300 = vmatpush1.msra.mxu0 0.0
      %301 = vmatprep.subr.mxu0 0.0
      %302 = vmatpush1.msra.mxu0 0.0
      %303 = vmatprep.subr.mxu0 0.0
      %304 = vmatpush1.msra.mxu0 0.0
      %305 = vmatprep.subr.mxu0 0.0
      %306 = vmatpush1.msra.mxu0 0.0
      %307 = vmatprep.subr.mxu0 0.0
      %308 = vmatpush1.msra.mxu0 0.0
      %309 = vmatprep.subr.mxu0 0.0
      %310 = vmatpush1.msra.mxu0 0.0
      %311 = vmatprep.subr.mxu0 0.0
      %312 = vmatpush1.msra.mxu0 0.0
      %313 = vmatprep.subr.mxu0 0.0
      %314 = vmatpush1.msra.mxu0 0.0
      %315 = vmatprep.subr.mxu0 0.0
      %316 = vmatpush1.msra.mxu0 0.0
      %317 = vmatprep.subr.mxu0 0.0
      %318 = vmatpush1.msra.mxu0 0.0
      %319 = vmatprep.subr.mxu0 0.0
      %320 = vmatpush1.msra.mxu0 0.0
      %321 = vmatprep.subr.mxu0 0.0
      %322 = vmatpush1.msra.mxu0 0.0
      %323 = vmatprep.mubr.f32.mxu0 0.0
      %324 = vmatmul.mubr.f32.gmra.mrb[0].mxu0 %v257
      %v325 = vpop.f32.mrb[0].mxu0
      %v326 = vadd.f32 %v254, %v325
      %v327 = vpop.f32.mrb[0].mxu0
      %328 = vdwg.mxu0
      %v329 = vmax.f32 %v326, 0.0
      %v330 = vld [vmem:[%s2] sm:$0xff]
      %v331 = vld [vmem:[%s2 + $0x8] sm:$0xff]
      %v332 = vld [vmem:[%s2 + $0x10] sm:$0xff]
      %v333 = vld [vmem:[%s2 + $0x18] sm:$0xff]
      %v334 = vld [vmem:[%s2 + $0x20] sm:$0xff]
      %v335 = vld [vmem:[%s2 + $0x28] sm:$0xff]
      %v336 = vld [vmem:[%s2 + $0x30] sm:$0xff]
      %v337 = vld [vmem:[%s2 + $0x38] sm:$0xff]
      %v338 = vlaneseq
      %v339 = vshrl.u32 %v338, 7
      %v340 = vsub.s32 1, %v339
      %v341 = vrot.slane %v247, %v340
      %vm342 = vcmask 523264
      %v344 = vsel %vm342, %v329, 0
      %346 = vmatprep.subr.mxu0 0.0
      %347 = vmatpush1.msra.mxu0 %v330
      %348 = vmatprep.subr.mxu0 0.0
      %349 = vmatpush1.msra.mxu0 %v331
      %350 = vmatprep.subr.mxu0 0.0
      %351 = vmatpush1.msra.mxu0 %v332
      %352 = vmatprep.subr.mxu0 0.0
      %353 = vmatpush1.msra.mxu0 %v333
      %354 = vmatprep.subr.mxu0 0.0
      %355 = vmatpush1.msra.mxu0 %v334
      %356 = vmatprep.subr.mxu0 0.0
      %357 = vmatpush1.msra.mxu0 %v335
      %358 = vmatprep.subr.mxu0 0.0
      %359 = vmatpush1.msra.mxu0 %v336
      %360 = vmatprep.subr.mxu0 0.0
      %361 = vmatpush1.msra.mxu0 %v337
      %362 = vmatprep.subr.mxu0 0.0
      %363 = vmatpush1.msra.mxu0 0.0
      %364 = vmatprep.subr.mxu0 0.0
      %365 = vmatpush1.msra.mxu0 0.0
      %366 = vmatprep.subr.mxu0 0.0
      %367 = vmatpush1.msra.mxu0 0.0
      %368 = vmatprep.subr.mxu0 0.0
      %369 = vmatpush1.msra.mxu0 0.0
      %370 = vmatprep.subr.mxu0 0.0
      %371 = vmatpush1.msra.mxu0 0.0
      %372 = vmatprep.subr.mxu0 0.0
      %373 = vmatpush1.msra.mxu0 0.0
      %374 = vmatprep.subr.mxu0 0.0
      %375 = vmatpush1.msra.mxu0 0.0
      %376 = vmatprep.subr.mxu0 0.0
      %377 = vmatpush1.msra.mxu0 0.0
      %378 = vmatprep.subr.mxu0 0.0
      %379 = vmatpush1.msra.mxu0 0.0
      %380 = vmatprep.subr.mxu0 0.0
      %381 = vmatpush1.msra.mxu0 0.0
      %382 = vmatprep.subr.mxu0 0.0
      %383 = vmatpush1.msra.mxu0 0.0
      %384 = vmatprep.subr.mxu0 0.0
      %385 = vmatpush1.msra.mxu0 0.0
      %386 = vmatprep.subr.mxu0 0.0
      %387 = vmatpush1.msra.mxu0 0.0
      %388 = vmatprep.subr.mxu0 0.0
      %389 = vmatpush1.msra.mxu0 0.0
      %390 = vmatprep.subr.mxu0 0.0
      %391 = vmatpush1.msra.mxu0 0.0
      %392 = vmatprep.subr.mxu0 0.0
      %393 = vmatpush1.msra.mxu0 0.0
      %394 = vmatprep.subr.mxu0 0.0
      %395 = vmatpush1.msra.mxu0 0.0
      %396 = vmatprep.subr.mxu0 0.0
      %397 = vmatpush1.msra.mxu0 0.0
      %398 = vmatprep.subr.mxu0 0.0
      %399 = vmatpush1.msra.mxu0 0.0
      %400 = vmatprep.subr.mxu0 0.0
      %401 = vmatpush1.msra.mxu0 0.0
      %402 = vmatprep.subr.mxu0 0.0
      %403 = vmatpush1.msra.mxu0 0.0
      %404 = vmatprep.subr.mxu0 0.0
      %405 = vmatpush1.msra.mxu0 0.0
      %406 = vmatprep.subr.mxu0 0.0
      %407 = vmatpush1.msra.mxu0 0.0
      %408 = vmatprep.subr.mxu0 0.0
      %409 = vmatpush1.msra.mxu0 0.0
      %410 = vmatprep.mubr.f32.mxu0 0.0
      %411 = vmatmul.mubr.f32.gmra.mrb[0].mxu0 %v344
      %v412 = vpop.f32.mrb[0].mxu0
      %v413 = vadd.f32 %v341, %v412
      %v414 = vpop.f32.mrb[0].mxu0
      %415 = vdwg.mxu0
      %v416 = vmax.f32 %v413, 0.0
      %v417 = vld [vmem:[%s3] sm:$0xff]
      %v418 = vld [vmem:[%s3 + $0x8] sm:$0xff]
      %v419 = vld [vmem:[%s3 + $0x10] sm:$0xff]
      %v420 = vld [vmem:[%s3 + $0x18] sm:$0xff]
      %v421 = vld [vmem:[%s3 + $0x20] sm:$0xff]
      %v422 = vld [vmem:[%s3 + $0x28] sm:$0xff]
      %v423 = vld [vmem:[%s3 + $0x30] sm:$0xff]
      %v424 = vld [vmem:[%s3 + $0x38] sm:$0xff]
      %v425 = vld [vmem:[%s3 + $0x40] sm:$0xff]
      %v426 = vld [vmem:[%s3 + $0x48] sm:$0xff]
      %v427 = vld [vmem:[%s3 + $0x50] sm:$0xff]
      %v428 = vld [vmem:[%s3 + $0x58] sm:$0xff]
      %v429 = vld [vmem:[%s3 + $0x60] sm:$0xff]
      %v430 = vld [vmem:[%s3 + $0x68] sm:$0xff]
      %v431 = vld [vmem:[%s3 + $0x70] sm:$0xff]
      %v432 = vld [vmem:[%s3 + $0x78] sm:$0xff]
      %v433 = vlaneseq
      %v434 = vshrl.u32 %v433, 7
      %v435 = vsub.s32 2, %v434
      %v436 = vrot.slane %v247, %v435
      %437 = vmatprep.subr.mxu0 0.0
      %438 = vmatpush1.msra.mxu0 %v417
      %439 = vmatprep.subr.mxu0 0.0
      %440 = vmatpush1.msra.mxu0 %v418
      %441 = vmatprep.subr.mxu0 0.0
      %442 = vmatpush1.msra.mxu0 %v419
      %443 = vmatprep.subr.mxu0 0.0
      %444 = vmatpush1.msra.mxu0 %v420
      %445 = vmatprep.subr.mxu0 0.0
      %446 = vmatpush1.msra.mxu0 %v421
      %447 = vmatprep.subr.mxu0 0.0
      %448 = vmatpush1.msra.mxu0 %v422
      %449 = vmatprep.subr.mxu0 0.0
      %450 = vmatpush1.msra.mxu0 %v423
      %451 = vmatprep.subr.mxu0 0.0
      %452 = vmatpush1.msra.mxu0 %v424
      %453 = vmatprep.subr.mxu0 0.0
      %454 = vmatpush1.msra.mxu0 %v425
      %455 = vmatprep.subr.mxu0 0.0
      %456 = vmatpush1.msra.mxu0 %v426
      %457 = vmatprep.subr.mxu0 0.0
      %458 = vmatpush1.msra.mxu0 %v427
      %459 = vmatprep.subr.mxu0 0.0
      %460 = vmatpush1.msra.mxu0 %v428
      %461 = vmatprep.subr.mxu0 0.0
      %462 = vmatpush1.msra.mxu0 %v429
      %463 = vmatprep.subr.mxu0 0.0
      %464 = vmatpush1.msra.mxu0 %v430
      %465 = vmatprep.subr.mxu0 0.0
      %466 = vmatpush1.msra.mxu0 %v431
      %467 = vmatprep.subr.mxu0 0.0
      %468 = vmatpush1.msra.mxu0 %v432
      %469 = vmatprep.subr.mxu0 0.0
      %470 = vmatpush1.msra.mxu0 0.0
      %471 = vmatprep.subr.mxu0 0.0
      %472 = vmatpush1.msra.mxu0 0.0
      %473 = vmatprep.subr.mxu0 0.0
      %474 = vmatpush1.msra.mxu0 0.0
      %475 = vmatprep.subr.mxu0 0.0
      %476 = vmatpush1.msra.mxu0 0.0
      %477 = vmatprep.subr.mxu0 0.0
      %478 = vmatpush1.msra.mxu0 0.0
      %479 = vmatprep.subr.mxu0 0.0
      %480 = vmatpush1.msra.mxu0 0.0
      %481 = vmatprep.subr.mxu0 0.0
      %482 = vmatpush1.msra.mxu0 0.0
      %483 = vmatprep.subr.mxu0 0.0
      %484 = vmatpush1.msra.mxu0 0.0
      %485 = vmatprep.subr.mxu0 0.0
      %486 = vmatpush1.msra.mxu0 0.0
      %487 = vmatprep.subr.mxu0 0.0
      %488 = vmatpush1.msra.mxu0 0.0
      %489 = vmatprep.subr.mxu0 0.0
      %490 = vmatpush1.msra.mxu0 0.0
      %491 = vmatprep.subr.mxu0 0.0
      %492 = vmatpush1.msra.mxu0 0.0
      %493 = vmatprep.subr.mxu0 0.0
      %494 = vmatpush1.msra.mxu0 0.0
      %495 = vmatprep.subr.mxu0 0.0
      %496 = vmatpush1.msra.mxu0 0.0
      %497 = vmatprep.subr.mxu0 0.0
      %498 = vmatpush1.msra.mxu0 0.0
      %499 = vmatprep.subr.mxu0 0.0
      %500 = vmatpush1.msra.mxu0 0.0
      %501 = vmatprep.mubr.f32.mxu0 0.0
      %502 = vmatmul.mubr.f32.gmra.mrb[0].mxu0 %v416
      %v503 = vpop.f32.mrb[0].mxu0
      %v504 = vadd.f32 %v436, %v503
      %v505 = vpop.f32.mrb[0].mxu0
      %506 = vdwg.mxu0
      %v507 = vmax.f32 %v504, 0.0
      %v508 = vld [vmem:[%s4] sm:$0xff]
      %v509 = vld [vmem:[%s4 + $0x8] sm:$0xff]
      %v510 = vld [vmem:[%s4 + $0x10] sm:$0xff]
      %v511 = vld [vmem:[%s4 + $0x18] sm:$0xff]
      %v512 = vld [vmem:[%s4 + $0x20] sm:$0xff]
      %v513 = vld [vmem:[%s4 + $0x28] sm:$0xff]
      %v514 = vld [vmem:[%s4 + $0x30] sm:$0xff]
      %v515 = vld [vmem:[%s4 + $0x38] sm:$0xff]
      %v516 = vlaneseq
      %v517 = vshrl.u32 %v516, 7
      %v518 = vsub.s32 3, %v517
      %v519 = vrot.slane %v247, %v518
      %v521 = vsel %vm342, %v507, 0
      %523 = vmatprep.subr.mxu0 0.0
      %524 = vmatpush1.msra.mxu0 %v508
      %525 = vmatprep.subr.mxu0 0.0
      %526 = vmatpush1.msra.mxu0 %v509
      %527 = vmatprep.subr.mxu0 0.0
      %528 = vmatpush1.msra.mxu0 %v510
      %529 = vmatprep.subr.mxu0 0.0
      %530 = vmatpush1.msra.mxu0 %v511
      %531 = vmatprep.subr.mxu0 0.0
      %532 = vmatpush1.msra.mxu0 %v512
      %533 = vmatprep.subr.mxu0 0.0
      %534 = vmatpush1.msra.mxu0 %v513
      %535 = vmatprep.subr.mxu0 0.0
      %536 = vmatpush1.msra.mxu0 %v514
      %537 = vmatprep.subr.mxu0 0.0
      %538 = vmatpush1.msra.mxu0 %v515
      %539 = vmatprep.subr.mxu0 0.0
      %540 = vmatpush1.msra.mxu0 0.0
      %541 = vmatprep.subr.mxu0 0.0
      %542 = vmatpush1.msra.mxu0 0.0
      %543 = vmatprep.subr.mxu0 0.0
      %544 = vmatpush1.msra.mxu0 0.0
      %545 = vmatprep.subr.mxu0 0.0
      %546 = vmatpush1.msra.mxu0 0.0
      %547 = vmatprep.subr.mxu0 0.0
      %548 = vmatpush1.msra.mxu0 0.0
      %549 = vmatprep.subr.mxu0 0.0
      %550 = vmatpush1.msra.mxu0 0.0
      %551 = vmatprep.subr.mxu0 0.0
      %552 = vmatpush1.msra.mxu0 0.0
      %553 = vmatprep.subr.mxu0 0.0
      %554 = vmatpush1.msra.mxu0 0.0
      %555 = vmatprep.subr.mxu0 0.0
      %556 = vmatpush1.msra.mxu0 0.0
      %557 = vmatprep.subr.mxu0 0.0
      %558 = vmatpush1.msra.mxu0 0.0
      %559 = vmatprep.subr.mxu0 0.0
      %560 = vmatpush1.msra.mxu0 0.0
      %561 = vmatprep.subr.mxu0 0.0
      %562 = vmatpush1.msra.mxu0 0.0
      %563 = vmatprep.subr.mxu0 0.0
      %564 = vmatpush1.msra.mxu0 0.0
      %565 = vmatprep.subr.mxu0 0.0
      %566 = vmatpush1.msra.mxu0 0.0
      %567 = vmatprep.subr.mxu0 0.0
      %568 = vmatpush1.msra.mxu0 0.0
      %569 = vmatprep.subr.mxu0 0.0
      %570 = vmatpush1.msra.mxu0 0.0
      %571 = vmatprep.subr.mxu0 0.0
      %572 = vmatpush1.msra.mxu0 0.0
      %573 = vmatprep.subr.mxu0 0.0
      %574 = vmatpush1.msra.mxu0 0.0
      %575 = vmatprep.subr.mxu0 0.0
      %576 = vmatpush1.msra.mxu0 0.0
      %577 = vmatprep.subr.mxu0 0.0
      %578 = vmatpush1.msra.mxu0 0.0
      %579 = vmatprep.subr.mxu0 0.0
      %580 = vmatpush1.msra.mxu0 0.0
      %581 = vmatprep.subr.mxu0 0.0
      %582 = vmatpush1.msra.mxu0 0.0
      %583 = vmatprep.subr.mxu0 0.0
      %584 = vmatpush1.msra.mxu0 0.0
      %585 = vmatprep.subr.mxu0 0.0
      %586 = vmatpush1.msra.mxu0 0.0
      %587 = vmatprep.mubr.f32.mxu0 0.0
      %588 = vmatmul.mubr.f32.gmra.mrb[0].mxu0 %v521
      %v589 = vpop.f32.mrb[0].mxu0
      %v590 = vadd.f32 %v519, %v589
      %v591 = vpop.f32.mrb[0].mxu0
      %592 = vdwg.mxu0
      %vm593 = vcmask 31744
      %594 = vst.msk [vmem:[%s246] sm:$0xff] %vm593, %v590
      %p595 = scmp.lt.s32.totalorder %s17, 1
      %s596 = scalar_select %p595, %s17, 1
      %s597 = smul.addr %s596, 8
      %s598 = scalar_lea.vmem %s6, %s597
      // Predicated region
      $region45: #{tpu_custom_call.1} parent=43 // pred_check
        %p599 = pneg %p166
      $region46: #{tpu_custom_call.1} parent=43 // pred_check_branch
        %601 = sbr.rel (%p599) target = $region48
      $region47: #{tpu_custom_call.1} parent=43 // pred_region
        _
      $region48: #{tpu_custom_call.1} parent=43 // pred_fallthru
        _
    $region44: #{tpu_custom_call.1} parent=5 // pred_fallthru
      _
    %p602 = scmp.le.s32.totalorder 2, %s12
    // Predicated region
    $region49: #{tpu_custom_call.1} parent=5 // pred_check
      %p603 = pneg %p602
    $region50: #{tpu_custom_call.1} parent=5 // pred_check_branch
      %605 = sbr.rel (%p603) target = $region52
    $region51: #{tpu_custom_call.1} parent=5 // pred_region
      %s606 = ssub.s32 %s12, 2
      // Predicated region
      $region53: #{tpu_custom_call.1} parent=51 // pred_check
        %p607 = pneg %p172
      $region54: #{tpu_custom_call.1} parent=51 // pred_check_branch
        %609 = sbr.rel (%p607) target = $region56
      $region55: #{tpu_custom_call.1} parent=51 // pred_region
        %p610 = scmp.lt.s32.totalorder %s18, 1
        %s611 = scalar_select %p610, %s18, 1
        %s612 = smul.addr %s611, 8
        %s613 = scalar_lea.vmem %s6, %s612
      $region56: #{tpu_custom_call.1} parent=51 // pred_fallthru
        _
    $region52: #{tpu_custom_call.1} parent=5 // pred_fallthru
      _
  $region6: #{tpu_custom_call.1} parent=0 // loop_footer
    %s16 = sadd.s32 1, %s12
  $region7: #{tpu_custom_call.1} parent=0 // loop_footer_branch
    %11 = sbr.rel target = $region3
  $region8: #{tpu_custom_call.1} parent=0 // loop_exit
    _

</llo_original>
